<compile_context>
chip_gen: v7x
topology: tpu7x:2x2x1
jax: 0.10.0
libtpu: 0.0.40
codegen_flags: <defaults>
</compile_context>

<pallas_src>
import jax
import jax.numpy as jnp
from jax.experimental import pallas as pl
from jax.experimental.pallas import tpu as pltpu

# ---------------------------------------------------------------------------
# Model hyper-parameters (small, consistent with the module's __init__).
# ---------------------------------------------------------------------------
N_OBS = 16
N_ACT = 4
REWARD_WEIGHTS = (1.0, 0.5)                      # len == n_reward
N_REWARD = len(REWARD_WEIGHTS)
N_HIDDEN = 32
N_LAYERS = 4                                     # DenseNet([MaxLayer]*4)
N_MAX = 3                                        # maxout pieces
N_OUT = N_REWARD + N_REWARD + N_ACT + N_REWARD   # reward|estimation|policy|delta = 10
BATCH = 8                                        # 8 sublanes -> aligned (8,128) output

N_IN = N_OBS + N_ACT                             # 20
PAD_IN = N_HIDDEN - N_IN                         # pad x to 32 lanes (extra W rows are 0)
LANES = 128                                      # lane-dense packing width
N_MATS = 1 + N_LAYERS + 1                        # input + 4 maxout + output = 6


# ---------------------------------------------------------------------------
# Pallas kernel: the entire forward hot path (6 fused matmuls).
# ---------------------------------------------------------------------------
def model_agent_kernel(obs_ref, act_ref, w_ref, b_ref, out_ref):
    bf16 = jnp.bfloat16
    batch = obs_ref.shape[0]

    # In-kernel torch.cat([obs, act], dim=1), zero-padded to 32 lanes
    # (padded weight rows are zero, so the result is unchanged).
    pad = jnp.zeros((batch, PAD_IN), dtype=bf16)
    x = jnp.concatenate(
        [obs_ref[...].astype(bf16), act_ref[...].astype(bf16), pad], axis=1)

    # self.inp : Linear(n_obs + n_act, n_hidden)   (packed into lanes 0:32)
    z = jnp.dot(x, w_ref[0], preferred_element_type=jnp.float32) + b_ref[0]
    h = z[:, :N_HIDDEN]

    # self.layer : 4 x MaxLayer(n_hidden, n_hidden, n_max=3).  The 3 pieces
    # are fused into one [32, 96] matmul per layer; max over 32-lane chunks.
    for l in range(1, 1 + N_LAYERS):   # static Python loop -> fully unrolled
        z = jnp.dot(h.astype(bf16), w_ref[l],
                    preferred_element_type=jnp.float32) + b_ref[l]
        h = jnp.maximum(
            jnp.maximum(z[:, 0 * N_HIDDEN:1 * N_HIDDEN],
                        z[:, 1 * N_HIDDEN:2 * N_HIDDEN]),
            z[:, 2 * N_HIDDEN:3 * N_HIDDEN])

    # self.out : Linear(n_hidden, 3*n_reward + n_act)   (packed into lanes 0:10)
    z = jnp.dot(h.astype(bf16), w_ref[1 + N_LAYERS],
                preferred_element_type=jnp.float32) + b_ref[1 + N_LAYERS]

    # Heads in ONE EUP pass over the lane-dense slab:
    #   cols [0, 2*n_reward)  -> sigmoid (reward, estimation)
    #   cols [2*n_reward, ..) -> tanh    (policy, delta; padding cols stay 0).
    # sigmoid(x) == 0.5 * tanh(0.5 * x) + 0.5  =>  a single tanh suffices.
    col = jax.lax.broadcasted_iota(jnp.int32, z.shape, 1)
    is_sig = col < 2 * N_REWARD
    t = jnp.tanh(jnp.where(is_sig, 0.5 * z, z))
    out_ref[...] = jnp.where(is_sig, 0.5 * t + 0.5, t)


# ---------------------------------------------------------------------------
# Wrapper: pallas_call + head slicing (lane-dense slab -> 4 heads).
# ---------------------------------------------------------------------------
@jax.jit
def model_agent_forward(obs, act, w_packed, b_packed):
    """Equivalent of ModelAgent.forward((obs, act)).  act may be None."""
    if act is None:
        act = jnp.zeros((obs.shape[0], N_ACT), dtype=obs.dtype)
    batch = obs.shape[0]

    vmem = pl.BlockSpec(memory_space=pltpu.MemorySpace.VMEM)
    out = pl.pallas_call(
        model_agent_kernel,
        out_shape=jax.ShapeDtypeStruct((batch, LANES), jnp.float32),
        in_specs=[vmem, vmem, vmem, vmem],
        out_specs=vmem,
    )(obs, act, w_packed, b_packed)

    reward     = out[:, :N_REWARD]
    estimation = out[:, N_REWARD:2 * N_REWARD]
    policy     = out[:, 2 * N_REWARD:2 * N_REWARD + N_ACT]
    delta      = out[:, 2 * N_REWARD + N_ACT:N_OUT]   # == out[:, -n_reward:] of the 10 real cols
    return reward, estimation, policy, delta


# ---------------------------------------------------------------------------
# Parameter init (PyTorch-Linear-style uniform) and one-time packing.
# ---------------------------------------------------------------------------
def init_params(key):
    def uniform(k, shape, fan_in):
        bound = 1.0 / jnp.sqrt(jnp.float32(fan_in))
        return jax.random.uniform(k, shape, jnp.float32, -bound, bound)

    ks = jax.random.split(key, 6)
    return {
        "w_in":  uniform(ks[0], (N_IN, N_HIDDEN), N_IN),
        "b_in":  uniform(ks[1], (1, N_HIDDEN), N_IN),
        "w_max": uniform(ks[2], (N_LAYERS, N_MAX, N_HIDDEN, N_HIDDEN), N_HIDDEN),
        "b_max": uniform(ks[3], (N_LAYERS, N_MAX, 1, N_HIDDEN), N_HIDDEN),
        "w_out": uniform(ks[4], (N_HIDDEN, N_OUT), N_HIDDEN),
        "b_out": uniform(ks[5], (1, N_OUT), N_HIDDEN),
    }


def pack_params(params):
    """Pack all weights into one lane-dense bf16 slab, biases into one f32 slab."""
    w = jnp.zeros((N_MATS, N_HIDDEN, LANES), jnp.float32)
    b = jnp.zeros((N_MATS, 1, LANES), jnp.float32)

    # Input linear: rows 0:20 (rest zero => zero-padded x is harmless).
    w = w.at[0, :N_IN, :N_HIDDEN].set(params["w_in"])
    b = b.at[0, 0, :N_HIDDEN].set(params["b_in"][0])

    # Maxout layers: fuse the 3 pieces along the output (lane) axis -> (32, 96).
    for l in range(N_LAYERS):
        wm = jnp.concatenate([params["w_max"][l, p] for p in range(N_MAX)], axis=1)
        bm = jnp.concatenate([params["b_max"][l, p, 0] for p in range(N_MAX)], axis=0)
        w = w.at[1 + l, :, :N_MAX * N_HIDDEN].set(wm)
        b = b.at[1 + l, 0, :N_MAX * N_HIDDEN].set(bm)

    # Output linear: lanes 0:10.
    w = w.at[1 + N_LAYERS, :, :N_OUT].set(params["w_out"])
    b = b.at[1 + N_LAYERS, 0, :N_OUT].set(params["b_out"][0])

    return w.astype(jnp.bfloat16), b   # weights bf16, biases stay f32


# Pure-JAX f32 reference (original module math) for a correctness check.
def reference_forward(obs, act, params):
    if act is None:
        act = jnp.zeros((obs.shape[0], N_ACT), dtype=obs.dtype)
    x = jnp.concatenate([obs, act], axis=1)
    h = x @ params["w_in"] + params["b_in"]
    for l in range(N_LAYERS):
        pieces = [h @ params["w_max"][l, p] + params["b_max"][l, p]
                  for p in range(N_MAX)]
        h = jnp.maximum(jnp.maximum(pieces[0], pieces[1]), pieces[2])
    out = h @ params["w_out"] + params["b_out"]
    return (jax.nn.sigmoid(out[:, :N_REWARD]),
            jax.nn.sigmoid(out[:, N_REWARD:2 * N_REWARD]),
            jnp.tanh(out[:, 2 * N_REWARD:2 * N_REWARD + N_ACT]),
            jnp.tanh(out[:, -N_REWARD:]))


if __name__ == "__main__":
    key = jax.random.PRNGKey(0)
    k_params, k_obs, k_act = jax.random.split(key, 3)

    params = init_params(k_params)
    w_packed, b_packed = pack_params(params)

    obs = jax.random.normal(k_obs, (BATCH, N_OBS), jnp.float32)
    act = jax.random.normal(k_act, (BATCH, N_ACT), jnp.float32)

    outs = model_agent_forward(obs, act, w_packed, b_packed)
    jax.block_until_ready(outs)

    # Sanity check vs. pure-f32 reference (bf16 matmul operands -> loose tol).
    ref = reference_forward(obs, act, params)
    for got, want in zip(outs, ref):
        assert got.shape == want.shape
        assert jnp.max(jnp.abs(got - want)) < 2e-2

    # Also exercise the act=None branch (zeros action), like reward_accuracy().
    outs_none = model_agent_forward(obs, None, w_packed, b_packed)
    jax.block_until_ready(outs_none)
    ref_none = reference_forward(obs, None, params)
    assert jnp.max(jnp.abs(outs_none[0] - ref_none[0])) < 2e-2

    print("KERNEL_OK")
</pallas_src>

<mosaic_0001>
module attributes {stable_mosaic.version = 11 : i64} {
  func.func @model_agent_kernel(%arg0: memref<8x16xf32, #tpu.memory_space<vmem>>, %arg1: memref<8x4xf32, #tpu.memory_space<vmem>>, %arg2: memref<6x32x128xbf16, #tpu.memory_space<vmem>>, %arg3: memref<6x1x128xf32, #tpu.memory_space<vmem>>, %arg4: memref<8x128xf32, #tpu.memory_space<vmem>>) attributes {dimension_semantics = [], scalar_prefetch = 0 : i64, scratch_operands = 0 : i64, tpu.core_type = #tpu.core_type<tc>} {
    %cst = arith.constant 0.000000e+00 : bf16
    %0 = vector.broadcast %cst : bf16 to vector<8x12xbf16>
    %c0 = arith.constant 0 : index
    %c0_0 = arith.constant 0 : index
    %1 = vector.load %arg0[%c0, %c0_0] : memref<8x16xf32, #tpu.memory_space<vmem>>, vector<8x16xf32>
    %2 = arith.truncf %1 : vector<8x16xf32> to vector<8x16xbf16>
    %c0_1 = arith.constant 0 : index
    %c0_2 = arith.constant 0 : index
    %3 = vector.load %arg1[%c0_1, %c0_2] : memref<8x4xf32, #tpu.memory_space<vmem>>, vector<8x4xf32>
    %4 = arith.truncf %3 : vector<8x4xf32> to vector<8x4xbf16>
    %5 = tpu.concatenate %2, %4, %0 in 1 : vector<8x16xbf16>, vector<8x4xbf16>, vector<8x12xbf16> -> vector<8x32xbf16>
    %c0_3 = arith.constant 0 : index
    %c0_4 = arith.constant 0 : index
    %c0_5 = arith.constant 0 : index
    %6 = vector.load %arg2[%c0_3, %c0_4, %c0_5] : memref<6x32x128xbf16, #tpu.memory_space<vmem>>, vector<1x32x128xbf16>
    %7 = vector.shape_cast %6 : vector<1x32x128xbf16> to vector<32x128xbf16>
    %cst_6 = arith.constant dense<0.000000e+00> : vector<8x128xf32>
    %8 = tpu.matmul %5, %7, %cst_6 {dimension_numbers = #tpu.dot_dimension_numbers<[1], [0], [0], [1], [0, 0, 1, 1], [], []>} : vector<8x32xbf16>, vector<32x128xbf16>, vector<8x128xf32> -> vector<8x128xf32>
    %c0_7 = arith.constant 0 : index
    %c0_8 = arith.constant 0 : index
    %c0_9 = arith.constant 0 : index
    %9 = vector.load %arg3[%c0_7, %c0_8, %c0_9] : memref<6x1x128xf32, #tpu.memory_space<vmem>>, vector<1x1x128xf32>
    %10 = vector.shape_cast %9 : vector<1x1x128xf32> to vector<1x128xf32>
    %11 = vector.broadcast %10 : vector<1x128xf32> to vector<8x128xf32>
    %12 = arith.addf %8, %11 : vector<8x128xf32>
    %13 = vector.extract_strided_slice %12 {offsets = [0, 0], sizes = [8, 32], strides = [1, 1]} : vector<8x128xf32> to vector<8x32xf32>
    %14 = arith.truncf %13 : vector<8x32xf32> to vector<8x32xbf16>
    %c1 = arith.constant 1 : index
    %c0_10 = arith.constant 0 : index
    %c0_11 = arith.constant 0 : index
    %15 = vector.load %arg2[%c1, %c0_10, %c0_11] : memref<6x32x128xbf16, #tpu.memory_space<vmem>>, vector<1x32x128xbf16>
    %16 = vector.shape_cast %15 : vector<1x32x128xbf16> to vector<32x128xbf16>
    %cst_12 = arith.constant dense<0.000000e+00> : vector<8x128xf32>
    %17 = tpu.matmul %14, %16, %cst_12 {dimension_numbers = #tpu.dot_dimension_numbers<[1], [0], [0], [1], [0, 0, 1, 1], [], []>} : vector<8x32xbf16>, vector<32x128xbf16>, vector<8x128xf32> -> vector<8x128xf32>
    %c1_13 = arith.constant 1 : index
    %c0_14 = arith.constant 0 : index
    %c0_15 = arith.constant 0 : index
    %18 = vector.load %arg3[%c1_13, %c0_14, %c0_15] : memref<6x1x128xf32, #tpu.memory_space<vmem>>, vector<1x1x128xf32>
    %19 = vector.shape_cast %18 : vector<1x1x128xf32> to vector<1x128xf32>
    %20 = vector.broadcast %19 : vector<1x128xf32> to vector<8x128xf32>
    %21 = arith.addf %17, %20 : vector<8x128xf32>
    %22 = vector.extract_strided_slice %21 {offsets = [0, 0], sizes = [8, 32], strides = [1, 1]} : vector<8x128xf32> to vector<8x32xf32>
    %23 = vector.extract_strided_slice %21 {offsets = [0, 32], sizes = [8, 32], strides = [1, 1]} : vector<8x128xf32> to vector<8x32xf32>
    %24 = arith.maximumf %22, %23 : vector<8x32xf32>
    %25 = vector.extract_strided_slice %21 {offsets = [0, 64], sizes = [8, 32], strides = [1, 1]} : vector<8x128xf32> to vector<8x32xf32>
    %26 = arith.maximumf %24, %25 : vector<8x32xf32>
    %27 = arith.truncf %26 : vector<8x32xf32> to vector<8x32xbf16>
    %c2 = arith.constant 2 : index
    %c0_16 = arith.constant 0 : index
    %c0_17 = arith.constant 0 : index
    %28 = vector.load %arg2[%c2, %c0_16, %c0_17] : memref<6x32x128xbf16, #tpu.memory_space<vmem>>, vector<1x32x128xbf16>
    %29 = vector.shape_cast %28 : vector<1x32x128xbf16> to vector<32x128xbf16>
    %cst_18 = arith.constant dense<0.000000e+00> : vector<8x128xf32>
    %30 = tpu.matmul %27, %29, %cst_18 {dimension_numbers = #tpu.dot_dimension_numbers<[1], [0], [0], [1], [0, 0, 1, 1], [], []>} : vector<8x32xbf16>, vector<32x128xbf16>, vector<8x128xf32> -> vector<8x128xf32>
    %c2_19 = arith.constant 2 : index
    %c0_20 = arith.constant 0 : index
    %c0_21 = arith.constant 0 : index
    %31 = vector.load %arg3[%c2_19, %c0_20, %c0_21] : memref<6x1x128xf32, #tpu.memory_space<vmem>>, vector<1x1x128xf32>
    %32 = vector.shape_cast %31 : vector<1x1x128xf32> to vector<1x128xf32>
    %33 = vector.broadcast %32 : vector<1x128xf32> to vector<8x128xf32>
    %34 = arith.addf %30, %33 : vector<8x128xf32>
    %35 = vector.extract_strided_slice %34 {offsets = [0, 0], sizes = [8, 32], strides = [1, 1]} : vector<8x128xf32> to vector<8x32xf32>
    %36 = vector.extract_strided_slice %34 {offsets = [0, 32], sizes = [8, 32], strides = [1, 1]} : vector<8x128xf32> to vector<8x32xf32>
    %37 = arith.maximumf %35, %36 : vector<8x32xf32>
    %38 = vector.extract_strided_slice %34 {offsets = [0, 64], sizes = [8, 32], strides = [1, 1]} : vector<8x128xf32> to vector<8x32xf32>
    %39 = arith.maximumf %37, %38 : vector<8x32xf32>
    %40 = arith.truncf %39 : vector<8x32xf32> to vector<8x32xbf16>
    %c3 = arith.constant 3 : index
    %c0_22 = arith.constant 0 : index
    %c0_23 = arith.constant 0 : index
    %41 = vector.load %arg2[%c3, %c0_22, %c0_23] : memref<6x32x128xbf16, #tpu.memory_space<vmem>>, vector<1x32x128xbf16>
    %42 = vector.shape_cast %41 : vector<1x32x128xbf16> to vector<32x128xbf16>
    %cst_24 = arith.constant dense<0.000000e+00> : vector<8x128xf32>
    %43 = tpu.matmul %40, %42, %cst_24 {dimension_numbers = #tpu.dot_dimension_numbers<[1], [0], [0], [1], [0, 0, 1, 1], [], []>} : vector<8x32xbf16>, vector<32x128xbf16>, vector<8x128xf32> -> vector<8x128xf32>
    %c3_25 = arith.constant 3 : index
    %c0_26 = arith.constant 0 : index
    %c0_27 = arith.constant 0 : index
    %44 = vector.load %arg3[%c3_25, %c0_26, %c0_27] : memref<6x1x128xf32, #tpu.memory_space<vmem>>, vector<1x1x128xf32>
    %45 = vector.shape_cast %44 : vector<1x1x128xf32> to vector<1x128xf32>
    %46 = vector.broadcast %45 : vector<1x128xf32> to vector<8x128xf32>
    %47 = arith.addf %43, %46 : vector<8x128xf32>
    %48 = vector.extract_strided_slice %47 {offsets = [0, 0], sizes = [8, 32], strides = [1, 1]} : vector<8x128xf32> to vector<8x32xf32>
    %49 = vector.extract_strided_slice %47 {offsets = [0, 32], sizes = [8, 32], strides = [1, 1]} : vector<8x128xf32> to vector<8x32xf32>
    %50 = arith.maximumf %48, %49 : vector<8x32xf32>
    %51 = vector.extract_strided_slice %47 {offsets = [0, 64], sizes = [8, 32], strides = [1, 1]} : vector<8x128xf32> to vector<8x32xf32>
    %52 = arith.maximumf %50, %51 : vector<8x32xf32>
    %53 = arith.truncf %52 : vector<8x32xf32> to vector<8x32xbf16>
    %c4 = arith.constant 4 : index
    %c0_28 = arith.constant 0 : index
    %c0_29 = arith.constant 0 : index
    %54 = vector.load %arg2[%c4, %c0_28, %c0_29] : memref<6x32x128xbf16, #tpu.memory_space<vmem>>, vector<1x32x128xbf16>
    %55 = vector.shape_cast %54 : vector<1x32x128xbf16> to vector<32x128xbf16>
    %cst_30 = arith.constant dense<0.000000e+00> : vector<8x128xf32>
    %56 = tpu.matmul %53, %55, %cst_30 {dimension_numbers = #tpu.dot_dimension_numbers<[1], [0], [0], [1], [0, 0, 1, 1], [], []>} : vector<8x32xbf16>, vector<32x128xbf16>, vector<8x128xf32> -> vector<8x128xf32>
    %c4_31 = arith.constant 4 : index
    %c0_32 = arith.constant 0 : index
    %c0_33 = arith.constant 0 : index
    %57 = vector.load %arg3[%c4_31, %c0_32, %c0_33] : memref<6x1x128xf32, #tpu.memory_space<vmem>>, vector<1x1x128xf32>
    %58 = vector.shape_cast %57 : vector<1x1x128xf32> to vector<1x128xf32>
    %59 = vector.broadcast %58 : vector<1x128xf32> to vector<8x128xf32>
    %60 = arith.addf %56, %59 : vector<8x128xf32>
    %61 = vector.extract_strided_slice %60 {offsets = [0, 0], sizes = [8, 32], strides = [1, 1]} : vector<8x128xf32> to vector<8x32xf32>
    %62 = vector.extract_strided_slice %60 {offsets = [0, 32], sizes = [8, 32], strides = [1, 1]} : vector<8x128xf32> to vector<8x32xf32>
    %63 = arith.maximumf %61, %62 : vector<8x32xf32>
    %64 = vector.extract_strided_slice %60 {offsets = [0, 64], sizes = [8, 32], strides = [1, 1]} : vector<8x128xf32> to vector<8x32xf32>
    %65 = arith.maximumf %63, %64 : vector<8x32xf32>
    %66 = arith.truncf %65 : vector<8x32xf32> to vector<8x32xbf16>
    %c5 = arith.constant 5 : index
    %c0_34 = arith.constant 0 : index
    %c0_35 = arith.constant 0 : index
    %67 = vector.load %arg2[%c5, %c0_34, %c0_35] : memref<6x32x128xbf16, #tpu.memory_space<vmem>>, vector<1x32x128xbf16>
    %68 = vector.shape_cast %67 : vector<1x32x128xbf16> to vector<32x128xbf16>
    %cst_36 = arith.constant dense<0.000000e+00> : vector<8x128xf32>
    %69 = tpu.matmul %66, %68, %cst_36 {dimension_numbers = #tpu.dot_dimension_numbers<[1], [0], [0], [1], [0, 0, 1, 1], [], []>} : vector<8x32xbf16>, vector<32x128xbf16>, vector<8x128xf32> -> vector<8x128xf32>
    %c5_37 = arith.constant 5 : index
    %c0_38 = arith.constant 0 : index
    %c0_39 = arith.constant 0 : index
    %70 = vector.load %arg3[%c5_37, %c0_38, %c0_39] : memref<6x1x128xf32, #tpu.memory_space<vmem>>, vector<1x1x128xf32>
    %71 = vector.shape_cast %70 : vector<1x1x128xf32> to vector<1x128xf32>
    %72 = vector.broadcast %71 : vector<1x128xf32> to vector<8x128xf32>
    %73 = arith.addf %69, %72 : vector<8x128xf32>
    %74 = tpu.iota {dimensions = array<i32: 1>} : vector<8x128xi32>
    %c4_i32 = arith.constant 4 : i32
    %75 = vector.broadcast %c4_i32 : i32 to vector<8x128xi32>
    %76 = arith.cmpi slt, %74, %75 : vector<8x128xi32>
    %cst_40 = arith.constant 5.000000e-01 : f32
    %77 = vector.broadcast %cst_40 : f32 to vector<8x128xf32>
    %78 = arith.mulf %77, %73 : vector<8x128xf32>
    %79 = arith.select %76, %78, %73 : vector<8x128xi1>, vector<8x128xf32>
    %80 = math.tanh %79 : vector<8x128xf32>
    %cst_41 = arith.constant 5.000000e-01 : f32
    %81 = vector.broadcast %cst_41 : f32 to vector<8x128xf32>
    %82 = arith.mulf %81, %80 : vector<8x128xf32>
    %cst_42 = arith.constant 5.000000e-01 : f32
    %83 = vector.broadcast %cst_42 : f32 to vector<8x128xf32>
    %84 = arith.addf %82, %83 : vector<8x128xf32>
    %85 = arith.select %76, %84, %80 : vector<8x128xi1>, vector<8x128xf32>
    %c0_43 = arith.constant 0 : index
    %c0_44 = arith.constant 0 : index
    %86 = vector.load %arg4[%c0_43, %c0_44] : memref<8x128xf32, #tpu.memory_space<vmem>>, vector<8x128xf32>
    tpu.vector_store %arg4[%c0_43, %c0_44], %85 {strides = array<i32>} : memref<8x128xf32, #tpu.memory_space<vmem>>, vector<8x128xf32>,
    return
  }
}

</mosaic_0001>

<llo_original>
// kernel: model_agent_forward.1
$region0: #{model_agent_forward.1}
  #allocation0 [shape = 'u32[]', space=smem, size = 0x4, offset = 0x4, fixed_abs, tag = 'smem constant byte address 0x4 - core index']
  #allocation1 [shape = 'u32[144,128]{1,0:T(1,128)}', space=vmem, size = 0x12000, scoped, tag = 'internal scratch']
  %s0 = inlined_call_operand.vmem [shape: f32[8,16], index: 0, kind: input, shape index: {}]
  %s1 = inlined_call_operand.vmem [shape: f32[8,4], index: 1, kind: input, shape index: {}]
  %s2 = inlined_call_operand.hbm [shape: bf16[6,32,128], index: 2, kind: input, shape index: {}]
  %s3 = inlined_call_operand.vmem [shape: f32[6,1,128], index: 3, kind: input, shape index: {}]
  %s4 = inlined_call_operand.vmem [shape: f32[8,128], index: 4, kind: output, shape index: {}]
  %s5 = sld [smem:[#allocation0]]
  $region30: #{model_agent_forward.1} parent=0
    _
  %s7 = ssub.s32 1, %s5
  %s8 = scalar_select 0, %s7, %s5
  $region1: #{model_agent_forward.1} parent=0
    #allocation2 [shape = 'u8[49152]{0}', space=vmem, size = 0xc000, scoped, tag = 'input window, operand 2, single buffered']
    #allocation3 [shape = 's32[1]{0}', space=sflag, size = 0x4, scoped, tag = 'scoped memory for model_agent_forward.1']
    %9 = vsyncpa [#allocation3], 0
    // Predicated region
    $region2: #{model_agent_forward.1} parent=1 // pred_check
      _
    $region3: #{model_agent_forward.1} parent=1 // pred_check_branch
      %11 = sbr.rel (0) target = $region5
    $region4: #{model_agent_forward.1} parent=1 // pred_region
      _
    $region5: #{model_agent_forward.1} parent=1 // pred_fallthru
      _
    // Predicated region
    $region6: #{model_agent_forward.1} parent=1 // pred_check
      _
    $region7: #{model_agent_forward.1} parent=1 // pred_check_branch
      %13 = sbr.rel (0) target = $region9
    $region8: #{model_agent_forward.1} parent=1 // pred_region
      _
    $region9: #{model_agent_forward.1} parent=1 // pred_fallthru
      _
    // Predicated region
    $region10: #{model_agent_forward.1} parent=1 // pred_check
      _
    $region11: #{model_agent_forward.1} parent=1 // pred_check_branch
      %15 = sbr.rel (0) target = $region13
    $region12: #{model_agent_forward.1} parent=1 // pred_region
      %s17 = ssub.s32 1536, 1536
      %18 = vsyncadd [#allocation3], %s17
      %s19 = sshll.u32 [#allocation2], 4
      %s20 = int_to_ptr.vmem [resolvable:$true] %s19
      %25 = dma.hbm_to_vmem [thread:$0]  %s2, 1536, %s20, [#allocation3], 64, 64, 4
    $region13: #{model_agent_forward.1} parent=1 // pred_fallthru
      _
    // Predicated region
    $region14: #{model_agent_forward.1} parent=1 // pred_check
      _
    $region15: #{model_agent_forward.1} parent=1 // pred_check_branch
      %27 = sbr.rel (0) target = $region17
    $region16: #{model_agent_forward.1} parent=1 // pred_region
      _
    $region17: #{model_agent_forward.1} parent=1 // pred_fallthru
      _
    // Predicated region
    $region18: #{model_agent_forward.1} parent=1 // pred_check
      _
    $region19: #{model_agent_forward.1} parent=1 // pred_check_branch
      %29 = sbr.rel (0) target = $region21
    $region20: #{model_agent_forward.1} parent=1 // pred_region
      %30 = dma.done [#allocation3], 1536
    $region21: #{model_agent_forward.1} parent=1 // pred_fallthru
      _
    %v32 = vld [vmem:[%s0] sm:$0xff]
    %v33 = vpack.c.bf16 %v32, %v32
    %v34 = vld [vmem:[%s1] sm:$0xff]
    %v35 = vpack.c.bf16 %v34, %v34
    %37 = vrot.lane.b32.xlu0 %v35, 16
    %v38 = vpop.permute.xlu0 %37
    %vm39 = vcmask 130048
    %v42 = vsel %vm39, %v33, %v38
    %vm43 = vcmask 162816
    %v45 = vsel %vm43, %v42, 0
    %v46 = vld [vmem:[#allocation2] sm:$0xf]
    %v47 = vld [vmem:[#allocation2 + $0x4] sm:$0xf]
    %v48 = vld [vmem:[#allocation2 + $0x8] sm:$0xf]
    %v49 = vld [vmem:[#allocation2 + $0xc] sm:$0xf]
    %v50 = vld [vmem:[%s3] sm:$0x1]
    %v52 = vlaneseq
    %v53 = vshrl.u32 %v52, 7
    %v54 = vsub.s32 0, %v53
    %v55 = vrot.slane %v50, %v54
    %v61 = vunpack.c.l.b16 %v46
    %v62 = vunpack.c.l.b16 %v47
    %v63 = vunpack.c.l.b16 %v48
    %v64 = vunpack.c.l.b16 %v49
    %v65 = vpack.c.b16 %v62, %v61
    %v66 = vpack.c.b16 %v64, %v63
    %vm69 = vcmask 261120
    %v70 = vsel %vm69, %v45, 0
    %72 = vmatprep.subr.bf16.mxu0 0
    %73 = vmatpush1.bf16.msra.mxu0 %v65
    %74 = vmatprep.subr.bf16.mxu0 0
    %75 = vmatpush1.bf16.msra.mxu0 %v66
    %76 = vmatprep.subr.bf16.mxu0 0
    %77 = vmatpush1.bf16.msra.mxu0 0
    %78 = vmatprep.subr.bf16.mxu0 0
    %79 = vmatpush1.bf16.msra.mxu0 0
    %80 = vmatprep.subr.bf16.mxu0 0
    %81 = vmatpush1.bf16.msra.mxu0 0
    %82 = vmatprep.subr.bf16.mxu0 0
    %83 = vmatpush1.bf16.msra.mxu0 0
    %84 = vmatprep.subr.bf16.mxu0 0
    %85 = vmatpush1.bf16.msra.mxu0 0
    %86 = vmatprep.subr.bf16.mxu0 0
    %87 = vmatpush1.bf16.msra.mxu0 0
    %88 = vmatprep.subr.bf16.mxu0 0
    %89 = vmatpush1.bf16.msra.mxu0 0
    %90 = vmatprep.subr.bf16.mxu0 0
    %91 = vmatpush1.bf16.msra.mxu0 0
    %92 = vmatprep.subr.bf16.mxu0 0
    %93 = vmatpush1.bf16.msra.mxu0 0
    %94 = vmatprep.subr.bf16.mxu0 0
    %95 = vmatpush1.bf16.msra.mxu0 0
    %96 = vmatprep.subr.bf16.mxu0 0
    %97 = vmatpush1.bf16.msra.mxu0 0
    %98 = vmatprep.subr.bf16.mxu0 0
    %99 = vmatpush1.bf16.msra.mxu0 0
    %100 = vmatprep.subr.bf16.mxu0 0
    %101 = vmatpush1.bf16.msra.mxu0 0
    %102 = vmatprep.subr.bf16.mxu0 0
    %103 = vmatpush1.bf16.msra.mxu0 0
    %104 = vmatprep.mubr.bf16.mxu0 0
    %105 = vmatmul.mubr.bf16.gmra.mrb[0].mxu0 %v70
    %v106 = vpop.f32.mrb[0].mxu0
    %v107 = vadd.f32 %v55, %v106
    %v108 = vpop.f32.mrb[0].mxu0
    %v109 = vpop.f32.mrb[0].mxu0
    %v110 = vpop.f32.mrb[0].mxu0
    %111 = vdwg.mxu0
    %v112 = vpack.c.bf16 %v107, %v107
    %s113 = scalar_lea.vmem [#allocation2], 16
    %v114 = vld [vmem:[%s113] sm:$0xf]
    %v115 = vld [vmem:[%s113 + $0x4] sm:$0xf]
    %v116 = vld [vmem:[%s113 + $0x8] sm:$0xf]
    %v117 = vld [vmem:[%s113 + $0xc] sm:$0xf]
    %s118 = scalar_lea.vmem %s3, 1
    %v119 = vld [vmem:[%s118] sm:$0x1]
    %v121 = vlaneseq
    %v122 = vshrl.u32 %v121, 7
    %v123 = vsub.s32 0, %v122
    %v124 = vrot.slane %v119, %v123
    %v130 = vunpack.c.l.b16 %v114
    %v131 = vunpack.c.l.b16 %v115
    %v132 = vunpack.c.l.b16 %v116
    %v133 = vunpack.c.l.b16 %v117
    %v134 = vpack.c.b16 %v131, %v130
    %v135 = vpack.c.b16 %v133, %v132
    %v139 = vsel %vm69, %v112, 0
    %141 = vmatprep.subr.bf16.mxu0 0
    %142 = vmatpush1.bf16.msra.mxu0 %v134
    %143 = vmatprep.subr.bf16.mxu0 0
    %144 = vmatpush1.bf16.msra.mxu0 %v135
    %145 = vmatprep.subr.bf16.mxu0 0
    %146 = vmatpush1.bf16.msra.mxu0 0
    %147 = vmatprep.subr.bf16.mxu0 0
    %148 = vmatpush1.bf16.msra.mxu0 0
    %149 = vmatprep.subr.bf16.mxu0 0
    %150 = vmatpush1.bf16.msra.mxu0 0
    %151 = vmatprep.subr.bf16.mxu0 0
    %152 = vmatpush1.bf16.msra.mxu0 0
    %153 = vmatprep.subr.bf16.mxu0 0
    %154 = vmatpush1.bf16.msra.mxu0 0
    %155 = vmatprep.subr.bf16.mxu0 0
    %156 = vmatpush1.bf16.msra.mxu0 0
    %157 = vmatprep.subr.bf16.mxu0 0
    %158 = vmatpush1.bf16.msra.mxu0 0
    %159 = vmatprep.subr.bf16.mxu0 0
    %160 = vmatpush1.bf16.msra.mxu0 0
    %161 = vmatprep.subr.bf16.mxu0 0
    %162 = vmatpush1.bf16.msra.mxu0 0
    %163 = vmatprep.subr.bf16.mxu0 0
    %164 = vmatpush1.bf16.msra.mxu0 0
    %165 = vmatprep.subr.bf16.mxu0 0
    %166 = vmatpush1.bf16.msra.mxu0 0
    %167 = vmatprep.subr.bf16.mxu0 0
    %168 = vmatpush1.bf16.msra.mxu0 0
    %169 = vmatprep.subr.bf16.mxu0 0
    %170 = vmatpush1.bf16.msra.mxu0 0
    %171 = vmatprep.subr.bf16.mxu0 0
    %172 = vmatpush1.bf16.msra.mxu0 0
    %173 = vmatprep.mubr.bf16.mxu0 0
    %174 = vmatmul.mubr.bf16.gmra.mrb[0].mxu0 %v139
    %v175 = vpop.f32.mrb[0].mxu0
    %v176 = vadd.f32 %v124, %v175
    %v177 = vpop.f32.mrb[0].mxu0
    %v178 = vpop.f32.mrb[0].mxu0
    %v179 = vpop.f32.mrb[0].mxu0
    %180 = vdwg.mxu0
    %182 = vrot.lane.b32.xlu0 %v176, 96
    %v183 = vpop.permute.xlu0 %182
    %v185 = vmax.f32 %v176, %v183
    %186 = vrot.lane.b32.xlu0 %v176, 64
    %v187 = vpop.permute.xlu0 %186
    %v189 = vmax.f32 %v185, %v187
    %v190 = vpack.c.bf16 %v189, %v189
    %s191 = scalar_lea.vmem [#allocation2], 32
    %v192 = vld [vmem:[%s191] sm:$0xf]
    %v193 = vld [vmem:[%s191 + $0x4] sm:$0xf]
    %v194 = vld [vmem:[%s191 + $0x8] sm:$0xf]
    %v195 = vld [vmem:[%s191 + $0xc] sm:$0xf]
    %s196 = scalar_lea.vmem %s3, 2
    %v197 = vld [vmem:[%s196] sm:$0x1]
    %v199 = vlaneseq
    %v200 = vshrl.u32 %v199, 7
    %v201 = vsub.s32 0, %v200
    %v202 = vrot.slane %v197, %v201
    %v208 = vunpack.c.l.b16 %v192
    %v209 = vunpack.c.l.b16 %v193
    %v210 = vunpack.c.l.b16 %v194
    %v211 = vunpack.c.l.b16 %v195
    %v212 = vpack.c.b16 %v209, %v208
    %v213 = vpack.c.b16 %v211, %v210
    %v217 = vsel %vm69, %v190, 0
    %219 = vmatprep.subr.bf16.mxu0 0
    %220 = vmatpush1.bf16.msra.mxu0 %v212
    %221 = vmatprep.subr.bf16.mxu0 0
    %222 = vmatpush1.bf16.msra.mxu0 %v213
    %223 = vmatprep.subr.bf16.mxu0 0
    %224 = vmatpush1.bf16.msra.mxu0 0
    %225 = vmatprep.subr.bf16.mxu0 0
    %226 = vmatpush1.bf16.msra.mxu0 0
    %227 = vmatprep.subr.bf16.mxu0 0
    %228 = vmatpush1.bf16.msra.mxu0 0
    %229 = vmatprep.subr.bf16.mxu0 0
    %230 = vmatpush1.bf16.msra.mxu0 0
    %231 = vmatprep.subr.bf16.mxu0 0
    %232 = vmatpush1.bf16.msra.mxu0 0
    %233 = vmatprep.subr.bf16.mxu0 0
    %234 = vmatpush1.bf16.msra.mxu0 0
    %235 = vmatprep.subr.bf16.mxu0 0
    %236 = vmatpush1.bf16.msra.mxu0 0
    %237 = vmatprep.subr.bf16.mxu0 0
    %238 = vmatpush1.bf16.msra.mxu0 0
    %239 = vmatprep.subr.bf16.mxu0 0
    %240 = vmatpush1.bf16.msra.mxu0 0
    %241 = vmatprep.subr.bf16.mxu0 0
    %242 = vmatpush1.bf16.msra.mxu0 0
    %243 = vmatprep.subr.bf16.mxu0 0
    %244 = vmatpush1.bf16.msra.mxu0 0
    %245 = vmatprep.subr.bf16.mxu0 0
    %246 = vmatpush1.bf16.msra.mxu0 0
    %247 = vmatprep.subr.bf16.mxu0 0
    %248 = vmatpush1.bf16.msra.mxu0 0
    %249 = vmatprep.subr.bf16.mxu0 0
    %250 = vmatpush1.bf16.msra.mxu0 0
    %251 = vmatprep.mubr.bf16.mxu0 0
    %252 = vmatmul.mubr.bf16.gmra.mrb[0].mxu0 %v217
    %v253 = vpop.f32.mrb[0].mxu0
    %v254 = vadd.f32 %v202, %v253
    %v255 = vpop.f32.mrb[0].mxu0
    %v256 = vpop.f32.mrb[0].mxu0
    %v257 = vpop.f32.mrb[0].mxu0
    %258 = vdwg.mxu0
    %260 = vrot.lane.b32.xlu0 %v254, 96
    %v261 = vpop.permute.xlu0 %260
    %v263 = vmax.f32 %v254, %v261
    %264 = vrot.lane.b32.xlu0 %v254, 64
    %v265 = vpop.permute.xlu0 %264
    %v267 = vmax.f32 %v263, %v265
    %v268 = vpack.c.bf16 %v267, %v267
    %s269 = scalar_lea.vmem [#allocation2], 48
    %v270 = vld [vmem:[%s269] sm:$0xf]
    %v271 = vld [vmem:[%s269 + $0x4] sm:$0xf]
    %v272 = vld [vmem:[%s269 + $0x8] sm:$0xf]
    %v273 = vld [vmem:[%s269 + $0xc] sm:$0xf]
    %s274 = scalar_lea.vmem %s3, 3
    %v275 = vld [vmem:[%s274] sm:$0x1]
    %v277 = vlaneseq
    %v278 = vshrl.u32 %v277, 7
    %v279 = vsub.s32 0, %v278
    %v280 = vrot.slane %v275, %v279
    %v286 = vunpack.c.l.b16 %v270
    %v287 = vunpack.c.l.b16 %v271
    %v288 = vunpack.c.l.b16 %v272
    %v289 = vunpack.c.l.b16 %v273
    %v290 = vpack.c.b16 %v287, %v286
    %v291 = vpack.c.b16 %v289, %v288
    %v295 = vsel %vm69, %v268, 0
    %297 = vmatprep.subr.bf16.mxu0 0
    %298 = vmatpush1.bf16.msra.mxu0 %v290
    %299 = vmatprep.subr.bf16.mxu0 0
    %300 = vmatpush1.bf16.msra.mxu0 %v291
    %301 = vmatprep.subr.bf16.mxu0 0
    %302 = vmatpush1.bf16.msra.mxu0 0
    %303 = vmatprep.subr.bf16.mxu0 0
    %304 = vmatpush1.bf16.msra.mxu0 0
    %305 = vmatprep.subr.bf16.mxu0 0
    %306 = vmatpush1.bf16.msra.mxu0 0
    %307 = vmatprep.subr.bf16.mxu0 0
    %308 = vmatpush1.bf16.msra.mxu0 0
    %309 = vmatprep.subr.bf16.mxu0 0
    %310 = vmatpush1.bf16.msra.mxu0 0
    %311 = vmatprep.subr.bf16.mxu0 0
    %312 = vmatpush1.bf16.msra.mxu0 0
    %313 = vmatprep.subr.bf16.mxu0 0
    %314 = vmatpush1.bf16.msra.mxu0 0
    %315 = vmatprep.subr.bf16.mxu0 0
    %316 = vmatpush1.bf16.msra.mxu0 0
    %317 = vmatprep.subr.bf16.mxu0 0
    %318 = vmatpush1.bf16.msra.mxu0 0
    %319 = vmatprep.subr.bf16.mxu0 0
    %320 = vmatpush1.bf16.msra.mxu0 0
    %321 = vmatprep.subr.bf16.mxu0 0
    %322 = vmatpush1.bf16.msra.mxu0 0
    %323 = vmatprep.subr.bf16.mxu0 0
    %324 = vmatpush1.bf16.msra.mxu0 0
    %325 = vmatprep.subr.bf16.mxu0 0
    %326 = vmatpush1.bf16.msra.mxu0 0
    %327 = vmatprep.subr.bf16.mxu0 0
    %328 = vmatpush1.bf16.msra.mxu0 0
    %329 = vmatprep.mubr.bf16.mxu0 0
    %330 = vmatmul.mubr.bf16.gmra.mrb[0].mxu0 %v295
    %v331 = vpop.f32.mrb[0].mxu0
    %v332 = vadd.f32 %v280, %v331
    %v333 = vpop.f32.mrb[0].mxu0
    %v334 = vpop.f32.mrb[0].mxu0
    %v335 = vpop.f32.mrb[0].mxu0
    %336 = vdwg.mxu0
    %338 = vrot.lane.b32.xlu0 %v332, 96
    %v339 = vpop.permute.xlu0 %338
    %v341 = vmax.f32 %v332, %v339
    %342 = vrot.lane.b32.xlu0 %v332, 64
    %v343 = vpop.permute.xlu0 %342
    %v345 = vmax.f32 %v341, %v343
    %v346 = vpack.c.bf16 %v345, %v345
    %s347 = scalar_lea.vmem [#allocation2], 64
    %v348 = vld [vmem:[%s347] sm:$0xf]
    %v349 = vld [vmem:[%s347 + $0x4] sm:$0xf]
    %v350 = vld [vmem:[%s347 + $0x8] sm:$0xf]
    %v351 = vld [vmem:[%s347 + $0xc] sm:$0xf]
    %s352 = scalar_lea.vmem %s3, 4
    %v353 = vld [vmem:[%s352] sm:$0x1]
    %v355 = vlaneseq
    %v356 = vshrl.u32 %v355, 7
    %v357 = vsub.s32 0, %v356
    %v358 = vrot.slane %v353, %v357
    %v364 = vunpack.c.l.b16 %v348
    %v365 = vunpack.c.l.b16 %v349
    %v366 = vunpack.c.l.b16 %v350
    %v367 = vunpack.c.l.b16 %v351
    %v368 = vpack.c.b16 %v365, %v364
    %v369 = vpack.c.b16 %v367, %v366
    %v373 = vsel %vm69, %v346, 0
    %375 = vmatprep.subr.bf16.mxu0 0
    %376 = vmatpush1.bf16.msra.mxu0 %v368
    %377 = vmatprep.subr.bf16.mxu0 0
    %378 = vmatpush1.bf16.msra.mxu0 %v369
    %379 = vmatprep.subr.bf16.mxu0 0
    %380 = vmatpush1.bf16.msra.mxu0 0
    %381 = vmatprep.subr.bf16.mxu0 0
    %382 = vmatpush1.bf16.msra.mxu0 0
    %383 = vmatprep.subr.bf16.mxu0 0
    %384 = vmatpush1.bf16.msra.mxu0 0
    %385 = vmatprep.subr.bf16.mxu0 0
    %386 = vmatpush1.bf16.msra.mxu0 0
    %387 = vmatprep.subr.bf16.mxu0 0
    %388 = vmatpush1.bf16.msra.mxu0 0
    %389 = vmatprep.subr.bf16.mxu0 0
    %390 = vmatpush1.bf16.msra.mxu0 0
    %391 = vmatprep.subr.bf16.mxu0 0
    %392 = vmatpush1.bf16.msra.mxu0 0
    %393 = vmatprep.subr.bf16.mxu0 0
    %394 = vmatpush1.bf16.msra.mxu0 0
    %395 = vmatprep.subr.bf16.mxu0 0
    %396 = vmatpush1.bf16.msra.mxu0 0
    %397 = vmatprep.subr.bf16.mxu0 0
    %398 = vmatpush1.bf16.msra.mxu0 0
    %399 = vmatprep.subr.bf16.mxu0 0
    %400 = vmatpush1.bf16.msra.mxu0 0
    %401 = vmatprep.subr.bf16.mxu0 0
    %402 = vmatpush1.bf16.msra.mxu0 0
    %403 = vmatprep.subr.bf16.mxu0 0
    %404 = vmatpush1.bf16.msra.mxu0 0
    %405 = vmatprep.subr.bf16.mxu0 0
    %406 = vmatpush1.bf16.msra.mxu0 0
    %407 = vmatprep.mubr.bf16.mxu0 0
    %408 = vmatmul.mubr.bf16.gmra.mrb[0].mxu0 %v373
    %v409 = vpop.f32.mrb[0].mxu0
    %v410 = vadd.f32 %v358, %v409
    %v411 = vpop.f32.mrb[0].mxu0
    %v412 = vpop.f32.mrb[0].mxu0
    %v413 = vpop.f32.mrb[0].mxu0
    %414 = vdwg.mxu0
    %416 = vrot.lane.b32.xlu0 %v410, 96
    %v417 = vpop.permute.xlu0 %416
    %v419 = vmax.f32 %v410, %v417
    %420 = vrot.lane.b32.xlu0 %v410, 64
    %v421 = vpop.permute.xlu0 %420
    %v423 = vmax.f32 %v419, %v421
    %v424 = vpack.c.bf16 %v423, %v423
    %s425 = scalar_lea.vmem [#allocation2], 80
    %v426 = vld [vmem:[%s425] sm:$0xf]
    %v427 = vld [vmem:[%s425 + $0x4] sm:$0xf]
    %v428 = vld [vmem:[%s425 + $0x8] sm:$0xf]
    %v429 = vld [vmem:[%s425 + $0xc] sm:$0xf]
    %s430 = scalar_lea.vmem %s3, 5
    %v431 = vld [vmem:[%s430] sm:$0x1]
    %v433 = vlaneseq
    %v434 = vshrl.u32 %v433, 7
    %v435 = vsub.s32 0, %v434
    %v436 = vrot.slane %v431, %v435
    %v442 = vunpack.c.l.b16 %v426
    %v443 = vunpack.c.l.b16 %v427
    %v444 = vunpack.c.l.b16 %v428
    %v445 = vunpack.c.l.b16 %v429
    %v446 = vpack.c.b16 %v443, %v442
    %v447 = vpack.c.b16 %v445, %v444
    %v451 = vsel %vm69, %v424, 0
    %453 = vmatprep.subr.bf16.mxu0 0
    %454 = vmatpush1.bf16.msra.mxu0 %v446
    %455 = vmatprep.subr.bf16.mxu0 0
    %456 = vmatpush1.bf16.msra.mxu0 %v447
    %457 = vmatprep.subr.bf16.mxu0 0
    %458 = vmatpush1.bf16.msra.mxu0 0
    %459 = vmatprep.subr.bf16.mxu0 0
    %460 = vmatpush1.bf16.msra.mxu0 0
    %461 = vmatprep.subr.bf16.mxu0 0
    %462 = vmatpush1.bf16.msra.mxu0 0
    %463 = vmatprep.subr.bf16.mxu0 0
    %464 = vmatpush1.bf16.msra.mxu0 0
    %465 = vmatprep.subr.bf16.mxu0 0
    %466 = vmatpush1.bf16.msra.mxu0 0
    %467 = vmatprep.subr.bf16.mxu0 0
    %468 = vmatpush1.bf16.msra.mxu0 0
    %469 = vmatprep.subr.bf16.mxu0 0
    %470 = vmatpush1.bf16.msra.mxu0 0
    %471 = vmatprep.subr.bf16.mxu0 0
    %472 = vmatpush1.bf16.msra.mxu0 0
    %473 = vmatprep.subr.bf16.mxu0 0
    %474 = vmatpush1.bf16.msra.mxu0 0
    %475 = vmatprep.subr.bf16.mxu0 0
    %476 = vmatpush1.bf16.msra.mxu0 0
    %477 = vmatprep.subr.bf16.mxu0 0
    %478 = vmatpush1.bf16.msra.mxu0 0
    %479 = vmatprep.subr.bf16.mxu0 0
    %480 = vmatpush1.bf16.msra.mxu0 0
    %481 = vmatprep.subr.bf16.mxu0 0
    %482 = vmatpush1.bf16.msra.mxu0 0
    %483 = vmatprep.subr.bf16.mxu0 0
    %484 = vmatpush1.bf16.msra.mxu0 0
    %485 = vmatprep.mubr.bf16.mxu0 0
    %486 = vmatmul.mubr.bf16.gmra.mrb[0].mxu0 %v451
    %v487 = vpop.f32.mrb[0].mxu0
    %v488 = vadd.f32 %v436, %v487
    %v489 = vpop.f32.mrb[0].mxu0
    %v490 = vpop.f32.mrb[0].mxu0
    %v491 = vpop.f32.mrb[0].mxu0
    %492 = vdwg.mxu0
    %v493 = vlaneseq
    %v494 = vand.u32 %v493, 127
    %vm495 = vcmp.lt.s32.totalorder %v494, 4
    %v496 = vmul.f32 %v488, 0.5
    %v497 = vsel %vm495, %v496, %v488
    %v498 = vtanh.pop %v497
    %v499 = vmul.f32 %v498, 0.5
    %v500 = vadd.f32 %v499, 0.5
    %v501 = vsel %vm495, %v500, %v498
    %502 = vst [vmem:[%s4] sm:$0xff] %v501
    // Predicated region
    $region22: #{model_agent_forward.1} parent=1 // pred_check
      _
    $region23: #{model_agent_forward.1} parent=1 // pred_check_branch
      %504 = sbr.rel (0) target = $region25
    $region24: #{model_agent_forward.1} parent=1 // pred_region
      _
    $region25: #{model_agent_forward.1} parent=1 // pred_fallthru
      _
    // Predicated region
    $region26: #{model_agent_forward.1} parent=1 // pred_check
      _
    $region27: #{model_agent_forward.1} parent=1 // pred_check_branch
      %506 = sbr.rel (0) target = $region29
    $region28: #{model_agent_forward.1} parent=1 // pred_region
      _
    $region29: #{model_agent_forward.1} parent=1 // pred_fallthru
      _
    %507 = vsyncpa [#allocation3], 1

</llo_original>
